<compile_context>
chip_gen: v7x
topology: tpu7x:2x2x1
jax: 0.10.0
libtpu: 0.0.40
codegen_flags: <defaults>
</compile_context>

<pallas_src>
import functools
import math

import jax
import jax.numpy as jnp
from jax.experimental import pallas as pl
from jax.experimental.pallas import tpu as pltpu

_LANE = 128
_SUBLANE = 8
_TM_CAP = 8192                  # max lanes per M stripe
_VMEM_WORKING_CAP = 24 << 20    # accounted VMEM working set (fits all gens)


def _round_up(v, mult):
    return ((v + mult - 1) // mult) * mult


def _cdiv(a, b):
    return (a + b - 1) // b


def _target_block_bytes():
    """Raw input bytes per reduction block (Pallas double-buffers it).

    4 MiB is at/above the measured ~85% HBM-roofline knee on v5e/v6e.  On
    v7x-class parts (~3.2 TB/s HBM, 64 MiB VMEM) use 8 MiB so the ~0.35 us
    per-grid-step overhead stays small relative to DMA time.
    """
    target = 4 << 20
    try:
        info = pltpu.get_tpu_info()
        vmem = getattr(info, "vmem_capacity_bytes", None)
        if vmem is not None and vmem <= (64 << 20):
            target = 8 << 20
    except Exception:
        pass
    return target


def _mean_pool_kernel(x_ref, o_ref, acc_ref, *, n_rows, block_n, kps, mask_tail):
    """Accumulate partial row-sums of x over the reduction (last) grid axis."""
    s = pl.program_id(0)          # N-split slot ("parallel")
    k = pl.program_id(2)          # reduction step within this split ("arbitrary")

    @pl.when(k == 0)
    def _init():
        acc_ref[...] = jnp.zeros_like(acc_ref)

    acc_rows, tm = acc_ref.shape

    def _accumulate(xb_f32):
        # (block_n, tm) -> (block_n/acc_rows, acc_rows, tm): pure VALU adds into
        # the persistent accumulator; no cross-sublane work in the hot path.
        acc_ref[...] += jnp.sum(xb_f32.reshape(-1, acc_rows, tm), axis=0)

    if mask_tail:
        # Intended (unclamped) global row offset of this block.  Blocks whose
        # intended range extends past n_rows (the ragged N edge, plus at most
        # one clamped duplicate block when the split is uneven) are masked.
        base = (s * kps + k) * block_n

        @pl.when(base + block_n <= n_rows)
        def _full():
            _accumulate(x_ref[...].astype(jnp.float32))

        @pl.when(base + block_n > n_rows)
        def _edge():
            xb = x_ref[...].astype(jnp.float32)
            rows = base + jax.lax.broadcasted_iota(jnp.int32, xb.shape, 0)
            _accumulate(jnp.where(rows < n_rows, xb, 0.0))
    else:
        _accumulate(x_ref[...].astype(jnp.float32))

    @pl.when(k == kps - 1)
    def _finalize():
        # Single cross-sublane 8->1 reduce, once per (split, M-stripe).
        o_ref[...] = jnp.sum(acc_ref[...], axis=0, keepdims=True).reshape(o_ref.shape)


def mean_pooling(x):
    """Equivalent of MeanPooling.forward: returns (x.mean(axis=0), None)."""
    if not jnp.issubdtype(x.dtype, jnp.floating):
        # torch.mean raises on integer tensors; mirror that instead of
        # silently truncating.
        raise TypeError("mean_pooling requires a floating-point input.")

    orig_shape = x.shape
    n = int(orig_shape[0])
    rest = tuple(int(d) for d in orig_shape[1:])
    m = int(math.prod(rest)) if rest else 1

    x2 = x.reshape(n, m)
    elem = jnp.dtype(x.dtype).itemsize
    sub = max(_SUBLANE, 32 // elem)          # sublane packing: f32 8, bf16 16, i8 32

    # ---- M tiling: fixed-width lane stripes; ragged edges handled in-kernel. ----
    tm = min(_round_up(m, _LANE), _TM_CAP)
    m_steps = _cdiv(m, tm)
    m_out = m_steps * tm                      # lane-dense f32 partial-sum output

    # ---- N blocking: sized by bytes (incl. f32-upcast temp), no host-side pad. ----
    target_bytes = _target_block_bytes()
    per_row_bytes = tm * (2 * elem + (4 if elem < 4 else 0))   # 2x bufs + upcast
    fixed_bytes = 8 * tm * 4 + 2 * tm * 4                       # acc + out blocks
    rows_cap_vmem = max(sub, (_VMEM_WORKING_CAP - fixed_bytes) // per_row_bytes)
    rows_budget = max(sub, min(target_bytes // (tm * elem), rows_cap_vmem))
    if _round_up(n, sub) <= rows_budget:
        block_n = n                           # whole reduction in a single block
    else:
        block_n = max(sub, (rows_budget // sub) * sub)
    total_blocks = _cdiv(n, block_n)

    # ---- Split N across two "parallel" slots when M gives only one stripe
    #      (keeps both TensorCores busy on megacore parts; free elsewhere). ----
    n_splits = 2 if (m_steps == 1 and total_blocks >= 2) else 1
    kps = _cdiv(total_blocks, n_splits)       # reduction steps per split
    mask_tail = n_splits * kps * block_n > n  # ragged / duplicated tail exists

    acc_rows = 8 if block_n % 8 == 0 else 1   # acc_rows=1 only when kps==1

    vmem_needed = (2 * block_n * tm * elem                      # double-buffered in
                   + (block_n * tm * 4 if elem < 4 else 0)      # f32 upcast temp
                   + acc_rows * tm * 4                          # accumulator
                   + 2 * tm * 4)                                # out block (x2)
    vmem_limit = int(min(32 << 20, max(16 << 20, vmem_needed + (4 << 20))))

    kernel = functools.partial(_mean_pool_kernel, n_rows=n, block_n=block_n,
                               kps=kps, mask_tail=mask_tail)

    last_block = total_blocks - 1

    def in_map(s, j, k):
        # Clamp so an uneven split never produces an out-of-range window; the
        # kernel's row mask zeroes the duplicate block's contribution.
        return (jnp.minimum(s * kps + k, last_block), j)

    partial = pl.pallas_call(
        kernel,
        out_shape=jax.ShapeDtypeStruct((n_splits, 1, m_out), jnp.float32),
        grid_spec=pltpu.PrefetchScalarGridSpec(
            num_scalar_prefetch=0,
            grid=(n_splits, m_steps, kps),
            in_specs=[pl.BlockSpec((block_n, tm), in_map)],
            out_specs=pl.BlockSpec((1, 1, tm), lambda s, j, k: (s, 0, j)),
            scratch_shapes=[pltpu.VMEM((acc_rows, tm), jnp.float32)],
        ),
        compiler_params=pltpu.CompilerParams(
            dimension_semantics=("parallel", "parallel", "arbitrary"),
            vmem_limit_bytes=vmem_limit,
        ),
        cost_estimate=pl.CostEstimate(
            flops=n * m,
            transcendentals=0,
            bytes_accessed=n * m * elem + n_splits * m_out * 4),
    )(x2)

    # Combine split partials, scale once by 1/n, cast, drop padded lanes.
    total = jnp.sum(partial, axis=(0, 1))[:m]
    mean = (total * (1.0 / n)).astype(x.dtype)
    return mean.reshape(rest), None


if __name__ == "__main__":
    key = jax.random.PRNGKey(0)
    k0, k1, k2, k3 = jax.random.split(key, 4)

    # Primary case: NCHW-style input, batch=2, C=4, H=W=16.
    x = jax.random.normal(k0, (2, 4, 16, 16), dtype=jnp.float32)
    pooled, extra = mean_pooling(x)
    pooled = jax.block_until_ready(pooled)
    ref = jnp.mean(x, axis=0)
    assert extra is None
    assert pooled.shape == ref.shape
    assert jnp.allclose(pooled, ref, atol=1e-6, rtol=1e-6)

    # Unaligned M (m=21 < 128) and unaligned N (n=5): partial-stripe path.
    y = jax.random.normal(k1, (5, 3, 7), dtype=jnp.float32)
    pooled_y, _ = mean_pooling(y)
    pooled_y = jax.block_until_ready(pooled_y)
    ref_y = jnp.mean(y, axis=0)
    assert pooled_y.shape == ref_y.shape
    assert jnp.allclose(pooled_y, ref_y, atol=1e-6, rtol=1e-6)

    # bf16 input: f32 accumulation path, cast back to bf16.
    z = jax.random.normal(k2, (4, 8, 32), dtype=jnp.bfloat16)
    pooled_z, _ = mean_pooling(z)
    pooled_z = jax.block_until_ready(pooled_z)
    ref_z = jnp.mean(z.astype(jnp.float32), axis=0).astype(jnp.bfloat16)
    assert pooled_z.shape == ref_z.shape
    assert jnp.allclose(pooled_z.astype(jnp.float32), ref_z.astype(jnp.float32),
                        atol=2e-2, rtol=2e-2)

    # Long-N case: exercises multi-block reduction, ragged N-edge masking and
    # (with default 4 MiB blocks) the 2-way N split with a clamped tail block.
    w = jax.random.normal(k3, (8200, 128), dtype=jnp.float32)
    pooled_w, _ = mean_pooling(w)
    pooled_w = jax.block_until_ready(pooled_w)
    ref_w = jnp.mean(w, axis=0)
    assert pooled_w.shape == ref_w.shape
    assert jnp.allclose(pooled_w, ref_w, atol=1e-5, rtol=1e-4)

    print("KERNEL_OK")
</pallas_src>

<mosaic_0001>
module attributes {stable_mosaic.version = 11 : i64} {
  func.func @_mean_pool_kernel(%arg0: i32, %arg1: i32, %arg2: i32, %arg3: memref<2x1024xf32, #tpu.memory_space<vmem>>, %arg4: memref<1x1x1024xf32, #tpu.memory_space<vmem>>, %arg5: memref<1x1024xf32, #tpu.memory_space<vmem>>) attributes {dimension_semantics = [#tpu.dimension_semantics<parallel>, #tpu.dimension_semantics<parallel>, #tpu.dimension_semantics<arbitrary>], iteration_bounds = array<i64: 1, 1, 1>, scalar_prefetch = 0 : i64, scratch_operands = 1 : i64, tpu.core_type = #tpu.core_type<tc>, window_params = [{transform_indices = @transform_0, window_bounds = array<i64: 2, 1024>}, {transform_indices = @transform_1, window_bounds = array<i64: 1, 1, 1024>}]} {
    %c0_i32 = arith.constant 0 : i32
    %0 = arith.cmpi eq, %arg2, %c0_i32 : i32
    %1 = arith.extui %0 : i1 to i32
    %c0_i32_0 = arith.constant 0 : i32
    %2 = arith.cmpi ne, %1, %c0_i32_0 : i32
    scf.if %2 {
      %cst_8 = arith.constant 0.000000e+00 : f32
      %12 = vector.broadcast %cst_8 : f32 to vector<1x1024xf32>
      %c0_9 = arith.constant 0 : index
      %c0_10 = arith.constant 0 : index
      %13 = vector.load %arg5[%c0_9, %c0_10] : memref<1x1024xf32, #tpu.memory_space<vmem>>, vector<1x1024xf32>
      tpu.vector_store %arg5[%c0_9, %c0_10], %12 {strides = array<i32>} : memref<1x1024xf32, #tpu.memory_space<vmem>>, vector<1x1024xf32>,
    } else {
    }
    %c0 = arith.constant 0 : index
    %c0_1 = arith.constant 0 : index
    %3 = vector.load %arg3[%c0, %c0_1] : memref<2x1024xf32, #tpu.memory_space<vmem>>, vector<2x1024xf32>
    %c0_2 = arith.constant 0 : index
    %c0_3 = arith.constant 0 : index
    %4 = vector.load %arg5[%c0_2, %c0_3] : memref<1x1024xf32, #tpu.memory_space<vmem>>, vector<1x1024xf32>
    %5 = vector.shape_cast %3 : vector<2x1024xf32> to vector<2x1x1024xf32>
    %cst = arith.constant dense<0.000000e+00> : vector<1x1024xf32>
    %6 = vector.multi_reduction <add>, %5, %cst [0] : vector<2x1x1024xf32> to vector<1x1024xf32>
    %7 = arith.addf %4, %6 : vector<1x1024xf32>
    %c0_4 = arith.constant 0 : index
    %c0_5 = arith.constant 0 : index
    %8 = vector.load %arg5[%c0_4, %c0_5] : memref<1x1024xf32, #tpu.memory_space<vmem>>, vector<1x1024xf32>
    tpu.vector_store %arg5[%c0_4, %c0_5], %7 {strides = array<i32>} : memref<1x1024xf32, #tpu.memory_space<vmem>>, vector<1x1024xf32>,
    %c0_i32_6 = arith.constant 0 : i32
    %9 = arith.cmpi eq, %arg2, %c0_i32_6 : i32
    %10 = arith.extui %9 : i1 to i32
    %c0_i32_7 = arith.constant 0 : i32
    %11 = arith.cmpi ne, %10, %c0_i32_7 : i32
    scf.if %11 {
      %c0_8 = arith.constant 0 : index
      %c0_9 = arith.constant 0 : index
      %12 = vector.load %arg5[%c0_8, %c0_9] : memref<1x1024xf32, #tpu.memory_space<vmem>>, vector<1x1024xf32>
      %cst_10 = arith.constant dense<0.000000e+00> : vector<1024xf32>
      %13 = vector.multi_reduction <add>, %12, %cst_10 [0] : vector<1x1024xf32> to vector<1024xf32>
      %14 = vector.shape_cast %13 : vector<1024xf32> to vector<1x1024xf32>
      %15 = vector.shape_cast %14 : vector<1x1024xf32> to vector<1x1x1024xf32>
      %c0_11 = arith.constant 0 : index
      %c0_12 = arith.constant 0 : index
      %c0_13 = arith.constant 0 : index
      %16 = vector.load %arg4[%c0_11, %c0_12, %c0_13] : memref<1x1x1024xf32, #tpu.memory_space<vmem>>, vector<1x1x1024xf32>
      tpu.vector_store %arg4[%c0_11, %c0_12, %c0_13], %15 {strides = array<i32>} : memref<1x1x1024xf32, #tpu.memory_space<vmem>>, vector<1x1x1024xf32>,
    } else {
    }
    return
  }
  func.func @transform_0(%arg0: i32, %arg1: i32, %arg2: i32) -> (i32, i32) {
    %c1_i32 = arith.constant 1 : i32
    %0 = arith.muli %arg0, %c1_i32 : i32
    %1 = arith.addi %0, %arg2 : i32
    %c0_i32 = arith.constant 0 : i32
    %2 = arith.minsi %1, %c0_i32 : i32
    %c0_i32_0 = arith.constant 0 : i32
    return %2, %arg1 : i32, i32
  }
  func.func @transform_1(%arg0: i32, %arg1: i32, %arg2: i32) -> (i32, i32, i32) {
    %c0_i32 = arith.constant 0 : i32
    %c0_i32_0 = arith.constant 0 : i32
    return %arg0, %c0_i32, %arg1 : i32, i32, i32
  }
}

</mosaic_0001>

<llo_original>
// kernel: tpu_custom_call.1
$region0: #{tpu_custom_call.1}
  #allocation0 [shape = 'u32[]', space=smem, size = 0x4, offset = 0x4, fixed_abs, tag = 'smem constant byte address 0x4 - core index']
  #allocation1 [shape = 'u32[144,128]{1,0:T(1,128)}', space=vmem, size = 0x12000, scoped, tag = 'internal scratch']
  #allocation2 [shape = 'f32[1,1024]{1,0:T(1,128)}', space=vmem, size = 0x1000, scoped, tag = 'scratch operand']
  %s0 = inlined_call_operand.hbm [shape: f32[2,1024], index: 0, kind: input, shape index: {}]
  %s1 = inlined_call_operand.hbm [shape: f32[1,1,1024], index: 1, kind: output, shape index: {}]
  %s2 = sld [smem:[#allocation0]]
  $region26: #{tpu_custom_call.1} parent=0
    _
  %s4 = ssub.s32 1, %s2
  %s5 = scalar_select 0, %s4, %s2
  $region1: #{tpu_custom_call.1} parent=0
    #allocation3 [shape = 'u8[8192]{0}', space=vmem, size = 0x2000, scoped, tag = 'input window, operand 0, single buffered']
    #allocation4 [shape = 's32[1]{0}', space=sflag, size = 0x4, scoped, tag = 'scoped memory for tpu_custom_call.1']
    #allocation5 [shape = 's32[1]{0}', space=sflag, size = 0x4, scoped, tag = 'scoped memory for tpu_custom_call.1']
    #allocation6 [shape = 'u8[4096]{0}', space=vmem, size = 0x1000, scoped, tag = 'output window, operand 0, single buffered']
    %6 = vsyncpa [#allocation4], 0
    %7 = vsyncpa [#allocation5], 0
    // Predicated region
    $region2: #{tpu_custom_call.1} parent=1 // pred_check
      _
    $region3: #{tpu_custom_call.1} parent=1 // pred_check_branch
      %9 = sbr.rel (0) target = $region5
    $region4: #{tpu_custom_call.1} parent=1 // pred_region
      %s10 = sadd.s32 0, 0
      %p11 = scmp.lt.s32.totalorder %s10, 0
      %s12 = scalar_select %p11, %s10, 0
      %s14 = ssub.s32 256, 256
      %15 = vsyncadd [#allocation4], %s14
      %s16 = smul.addr %s12, 8
      %s17 = smul.addr %s16, 32
      %s18 = scalar_lea.hbm %s0, %s17
      %s20 = sshll.u32 [#allocation3], 4
      %s21 = int_to_ptr.vmem [resolvable:$true] %s20
      %23 = dma.hbm_to_vmem [thread:$0]  %s18, 256, %s21, [#allocation4]
    $region5: #{tpu_custom_call.1} parent=1 // pred_fallthru
      _
    // Predicated region
    $region6: #{tpu_custom_call.1} parent=1 // pred_check
      _
    $region7: #{tpu_custom_call.1} parent=1 // pred_check_branch
      %25 = sbr.rel (0) target = $region9
    $region8: #{tpu_custom_call.1} parent=1 // pred_region
      %26 = dma.done [#allocation4], 256
    $region9: #{tpu_custom_call.1} parent=1 // pred_fallthru
      _
    %s27 = sadd.s32 0, 0
    %p28 = scmp.lt.s32.totalorder %s27, 0
    %s29 = scalar_select %p28, %s27, 0
    %p30 = scmp.eq.s32.totalorder 0, 0
    // Predicated region
    $region10: #{tpu_custom_call.1} parent=1 // pred_check
      %p31 = pneg %p30
    $region11: #{tpu_custom_call.1} parent=1 // pred_check_branch
      %33 = sbr.rel (%p31) target = $region13
    $region12: #{tpu_custom_call.1} parent=1 // pred_region
      %34 = vst [vmem:[#allocation2] sm:$0xff] 0.0
    $region13: #{tpu_custom_call.1} parent=1 // pred_fallthru
      _
    %v35 = vld [vmem:[#allocation3] sm:$0xff]
    %v36 = vld [vmem:[#allocation3 + $0x8] sm:$0xff]
    %v37 = vld [vmem:[#allocation2] sm:$0xff]
    %v41 = vunpack.c.l.s4 1966171168
    %v42 = vunpack.c.0.s8 %v41
    %v43 = vlaneseq
    %v44 = vshrl.u32 %v43, 7
    %v45 = vsub.s32 %v42, %v44
    %v46 = vrot.slane %v35, %v45
    %v48 = vunpack.c.l.s4 1966171168
    %v49 = vunpack.c.0.s8 %v48
    %v50 = vlaneseq
    %v51 = vshrl.u32 %v50, 7
    %v52 = vsub.s32 %v49, %v51
    %v53 = vrot.slane %v36, %v52
    %v54 = vcombine.low %v46, %v53
    %v55 = vcombine.high %v46, %v53
    %v56 = vlaneseq
    %v57 = vshrl.u32 %v56, 7
    %v58 = vsub.s32 0, %v57
    %v59 = vrot.slane %v54, %v58
    %v60 = vlaneseq
    %v61 = vshrl.u32 %v60, 7
    %v62 = vsub.s32 1, %v61
    %v63 = vrot.slane %v54, %v62
    %v64 = vlaneseq
    %v65 = vshrl.u32 %v64, 7
    %v66 = vsub.s32 2, %v65
    %v67 = vrot.slane %v54, %v66
    %v68 = vlaneseq
    %v69 = vshrl.u32 %v68, 7
    %v70 = vsub.s32 3, %v69
    %v71 = vrot.slane %v54, %v70
    %v72 = vlaneseq
    %v73 = vshrl.u32 %v72, 7
    %v74 = vsub.s32 4, %v73
    %v75 = vrot.slane %v54, %v74
    %v76 = vlaneseq
    %v77 = vshrl.u32 %v76, 7
    %v78 = vsub.s32 5, %v77
    %v79 = vrot.slane %v54, %v78
    %v80 = vlaneseq
    %v81 = vshrl.u32 %v80, 7
    %v82 = vsub.s32 6, %v81
    %v83 = vrot.slane %v54, %v82
    %v84 = vlaneseq
    %v85 = vshrl.u32 %v84, 7
    %v86 = vsub.s32 7, %v85
    %v87 = vrot.slane %v54, %v86
    %v88 = vlaneseq
    %v89 = vshrl.u32 %v88, 7
    %v90 = vsub.s32 0, %v89
    %v91 = vrot.slane %v55, %v90
    %v92 = vlaneseq
    %v93 = vshrl.u32 %v92, 7
    %v94 = vsub.s32 1, %v93
    %v95 = vrot.slane %v55, %v94
    %v96 = vlaneseq
    %v97 = vshrl.u32 %v96, 7
    %v98 = vsub.s32 2, %v97
    %v99 = vrot.slane %v55, %v98
    %v100 = vlaneseq
    %v101 = vshrl.u32 %v100, 7
    %v102 = vsub.s32 3, %v101
    %v103 = vrot.slane %v55, %v102
    %v104 = vlaneseq
    %v105 = vshrl.u32 %v104, 7
    %v106 = vsub.s32 4, %v105
    %v107 = vrot.slane %v55, %v106
    %v108 = vlaneseq
    %v109 = vshrl.u32 %v108, 7
    %v110 = vsub.s32 5, %v109
    %v111 = vrot.slane %v55, %v110
    %v112 = vlaneseq
    %v113 = vshrl.u32 %v112, 7
    %v114 = vsub.s32 6, %v113
    %v115 = vrot.slane %v55, %v114
    %v116 = vlaneseq
    %v117 = vshrl.u32 %v116, 7
    %v118 = vsub.s32 7, %v117
    %v119 = vrot.slane %v55, %v118
    %vm136 = vcmask 1040384
    %v137 = vsel %vm136, %v59, 0.0
    %v138 = vsel %vm136, %v91, 0.0
    %v139 = vadd.f32 %v137, %v138
    %v140 = vsel %vm136, %v63, 0.0
    %v141 = vsel %vm136, %v95, 0.0
    %v142 = vadd.f32 %v140, %v141
    %v143 = vsel %vm136, %v67, 0.0
    %v144 = vsel %vm136, %v99, 0.0
    %v145 = vadd.f32 %v143, %v144
    %v146 = vsel %vm136, %v71, 0.0
    %v147 = vsel %vm136, %v103, 0.0
    %v148 = vadd.f32 %v146, %v147
    %v149 = vsel %vm136, %v75, 0.0
    %v150 = vsel %vm136, %v107, 0.0
    %v151 = vadd.f32 %v149, %v150
    %v152 = vsel %vm136, %v79, 0.0
    %v153 = vsel %vm136, %v111, 0.0
    %v154 = vadd.f32 %v152, %v153
    %v155 = vsel %vm136, %v83, 0.0
    %v156 = vsel %vm136, %v115, 0.0
    %v157 = vadd.f32 %v155, %v156
    %v158 = vsel %vm136, %v87, 0.0
    %v159 = vsel %vm136, %v119, 0.0
    %v160 = vadd.f32 %v158, %v159
    %v169 = vcombine.low %v139, %v142
    %v170 = vcombine.low %v145, %v148
    %v171 = vcombine.low %v151, %v154
    %v172 = vcombine.low %v157, %v160
    %v174 = vunpack.c.l.s4 1966171168
    %v175 = vunpack.c.0.s8 %v174
    %v176 = vlaneseq
    %v177 = vshrl.u32 %v176, 7
    %v178 = vsub.s32 %v175, %v177
    %v179 = vrot.slane %v169, %v178
    %v181 = vunpack.c.l.s4 1966171168
    %v182 = vunpack.c.0.s8 %v181
    %v183 = vlaneseq
    %v184 = vshrl.u32 %v183, 7
    %v185 = vsub.s32 %v182, %v184
    %v186 = vrot.slane %v170, %v185
    %v188 = vunpack.c.l.s4 1966171168
    %v189 = vunpack.c.0.s8 %v188
    %v190 = vlaneseq
    %v191 = vshrl.u32 %v190, 7
    %v192 = vsub.s32 %v189, %v191
    %v193 = vrot.slane %v171, %v192
    %v195 = vunpack.c.l.s4 1966171168
    %v196 = vunpack.c.0.s8 %v195
    %v197 = vlaneseq
    %v198 = vshrl.u32 %v197, 7
    %v199 = vsub.s32 %v196, %v198
    %v200 = vrot.slane %v172, %v199
    %v201 = vcombine.low %v179, %v186
    %v202 = vcombine.low %v193, %v200
    %v204 = vunpack.c.l.s4 1966171168
    %v205 = vunpack.c.0.s8 %v204
    %v206 = vlaneseq
    %v207 = vshrl.u32 %v206, 7
    %v208 = vsub.s32 %v205, %v207
    %v209 = vrot.slane %v201, %v208
    %v211 = vunpack.c.l.s4 1966171168
    %v212 = vunpack.c.0.s8 %v211
    %v213 = vlaneseq
    %v214 = vshrl.u32 %v213, 7
    %v215 = vsub.s32 %v212, %v214
    %v216 = vrot.slane %v202, %v215
    %v217 = vcombine.low %v209, %v216
    %v219 = vadd.f32 %v37, %v217
    %220 = vst [vmem:[#allocation2] sm:$0xff] %v219
    // Predicated region
    $region14: #{tpu_custom_call.1} parent=1 // pred_check
      %p221 = pneg %p30
    $region15: #{tpu_custom_call.1} parent=1 // pred_check_branch
      %223 = sbr.rel (%p221) target = $region17
    $region16: #{tpu_custom_call.1} parent=1 // pred_region
      %v224 = vld [vmem:[#allocation2] sm:$0xff]
      %v225 = vadd.f32 %v224, 0.0
      %226 = vst [vmem:[#allocation6] sm:$0xff] %v225
    $region17: #{tpu_custom_call.1} parent=1 // pred_fallthru
      _
    // Predicated region
    $region18: #{tpu_custom_call.1} parent=1 // pred_check
      _
    $region19: #{tpu_custom_call.1} parent=1 // pred_check_branch
      %228 = sbr.rel (0) target = $region21
    $region20: #{tpu_custom_call.1} parent=1 // pred_region
      %s230 = ssub.s32 128, 128
      %231 = vsyncadd [#allocation5], %s230
      %s233 = sshll.u32 [#allocation6], 4
      %s234 = int_to_ptr.vmem [resolvable:$true] %s233
      %236 = dma.vmem_to_hbm [thread:$0]  %s234, 128, %s1, [#allocation5]
    $region21: #{tpu_custom_call.1} parent=1 // pred_fallthru
      _
    // Predicated region
    $region22: #{tpu_custom_call.1} parent=1 // pred_check
      _
    $region23: #{tpu_custom_call.1} parent=1 // pred_check_branch
      %238 = sbr.rel (0) target = $region25
    $region24: #{tpu_custom_call.1} parent=1 // pred_region
      %239 = dma.done [#allocation5], 128
    $region25: #{tpu_custom_call.1} parent=1 // pred_fallthru
      _
    %240 = vsyncpa [#allocation4], 1
    %241 = vsyncpa [#allocation5], 1

</llo_original>
